<compile_context>
chip_gen: v5e
topology: v5e:2x2
jax: 0.10.0
libtpu: 0.0.40
codegen_flags: <defaults>
</compile_context>

<pallas_src>
import jax
import jax.numpy as jnp
from jax.experimental import pallas as pl
from jax.experimental.pallas import tpu as pltpu


_LN2 = 0.6931471805599453
_VMEM_WORKING_SET_BUDGET = 40 * 1024 * 1024   # bytes; conservative for v7x (64 MiB/TC)
_VMEM_LIMIT_BYTES = 50 * 1024 * 1024          # scoped VMEM limit passed to Mosaic


def _round_up(x, m):
    return ((x + m - 1) // m) * m


def _choose_tile_rows(R, D):
    """Pick the row-tile size from the VMEM budget.

    Per grid step (f32): 2 inputs x 2 pipeline buffers = 16*TM*D bytes of DMA
    staging plus ~6 live (TM, D) f32 temporaries in the kernel body, i.e. roughly
    10 f32 (TM, D) slabs -> 40*TM*D bytes.  Solve for TM under the budget.
    """
    per_row_bytes = 10 * D * 4
    tm = _VMEM_WORKING_SET_BUDGET // per_row_bytes
    tm = max(8, (tm // 8) * 8)            # sublane-aligned
    tm = min(tm, 2048)                    # diminishing returns past ~1-2K rows/step
    tm = min(tm, _round_up(R, 8))         # never (much) bigger than the row count
    # Keep >= 2 grid steps so v7x can shard the row axis across its 2 TensorCores.
    if tm >= R and R > 8:
        tm = max(8, _round_up(pl.cdiv(R, 2), 8))
    return tm


def _jsd_kernel(p_ref, q_ref, o_ref):
    eps = jnp.float32(1e-10)
    p = p_ref[...].astype(jnp.float32) + eps
    q = q_ref[...].astype(jnp.float32) + eps

    # Row-normalize into probability distributions (exact reciprocal: approx EUP
    # rcp alone can exceed the 1e-5 end-to-end tolerance).
    p = p * pl.reciprocal(jnp.sum(p, axis=-1, keepdims=True), approx=False)
    q = q * pl.reciprocal(jnp.sum(q, axis=-1, keepdims=True), approx=False)

    # With m = (p + q)/2 and s = p + q:
    #   kl_pm + kl_qm = p*log p + q*log q - s*log s + s*ln2
    # and sum_row(s) == 2, so the s*ln2 term folds into a scalar "+ ln2" after
    # the 0.5 * sum.
    s = p + q
    integrand = p * jnp.log(p) + q * jnp.log(q) - s * jnp.log(s)
    jsd = 0.5 * jnp.sum(integrand, axis=-1, keepdims=True) + _LN2  # (TM, 1)
    o_ref[...] = jsd.astype(o_ref.dtype)


def jsd_pallas(p, q, *, tile_rows=None):
    assert p.shape == q.shape, "p and q must have identical shapes"
    *lead, D = p.shape
    R = 1
    for s in lead:
        R *= s
    p2 = p.reshape(R, D)
    q2 = q.reshape(R, D)

    tm = tile_rows if tile_rows is not None else _choose_tile_rows(R, D)
    grid = (pl.cdiv(R, tm),)  # partial last block handled by Pallas -> no input copy

    out = pl.pallas_call(
        _jsd_kernel,
        out_shape=jax.ShapeDtypeStruct((R, 1), jnp.float32),
        grid_spec=pltpu.PrefetchScalarGridSpec(
            num_scalar_prefetch=0,
            grid=grid,
            in_specs=[
                pl.BlockSpec((tm, D), lambda i: (i, 0)),
                pl.BlockSpec((tm, D), lambda i: (i, 0)),
            ],
            out_specs=pl.BlockSpec((tm, 1), lambda i: (i, 0)),
        ),
        compiler_params=pltpu.CompilerParams(
            dimension_semantics=("parallel",),
            vmem_limit_bytes=_VMEM_LIMIT_BYTES,
        ),
    )(p2, q2)

    return out[:, 0].reshape(tuple(lead))


def jsd_reference(p, q):
    eps = 1e-10
    p = p.astype(jnp.float32) + eps
    q = q.astype(jnp.float32) + eps
    p = p / jnp.sum(p, axis=-1, keepdims=True)
    q = q / jnp.sum(q, axis=-1, keepdims=True)
    m = 0.5 * (p + q)
    log_m = jnp.log(m)
    kl_pm = p * (jnp.log(p) - log_m)
    kl_qm = q * (jnp.log(q) - log_m)
    return 0.5 * jnp.sum(kl_pm + kl_qm, axis=-1)


if __name__ == "__main__":
    key = jax.random.PRNGKey(0)
    kp, kq, kp2, kq2 = jax.random.split(key, 4)

    # Small shapes: batch=2, seq=8, hidden(D)=32; last dim is the distribution axis.
    shape = (2, 8, 32)
    p = jax.random.uniform(kp, shape, dtype=jnp.float32)
    q = jax.random.uniform(kq, shape, dtype=jnp.float32)

    out = jsd_pallas(p, q)
    out = jax.block_until_ready(out)
    ref = jsd_reference(p, q)
    assert out.shape == shape[:-1], (out.shape, shape[:-1])
    assert jnp.allclose(out, ref, atol=1e-5, rtol=1e-5), (
        "mismatch vs reference", out, ref)

    # Row count not a multiple of the tile -> exercises the partial last block
    # (no input padding copy in the wrapper anymore).
    shape2 = (3, 5, 32)
    p2 = jax.random.uniform(kp2, shape2, dtype=jnp.float32)
    q2 = jax.random.uniform(kq2, shape2, dtype=jnp.float32)
    out2 = jax.block_until_ready(jsd_pallas(p2, q2))
    ref2 = jsd_reference(p2, q2)
    assert out2.shape == shape2[:-1], (out2.shape, shape2[:-1])
    assert jnp.allclose(out2, ref2, atol=1e-5, rtol=1e-5), (
        "mismatch vs reference (partial tile)", out2, ref2)

    print("KERNEL_OK")
</pallas_src>

<mosaic_0001>
module attributes {stable_mosaic.version = 11 : i64} {
  func.func @_jsd_kernel(%arg0: i32, %arg1: memref<8x32xf32, #tpu.memory_space<vmem>>, %arg2: memref<8x32xf32, #tpu.memory_space<vmem>>, %arg3: memref<8x1xf32, #tpu.memory_space<vmem>>) attributes {dimension_semantics = [#tpu.dimension_semantics<parallel>], iteration_bounds = array<i64: 2>, scalar_prefetch = 0 : i64, scratch_operands = 0 : i64, tpu.core_type = #tpu.core_type<tc>, window_params = [{transform_indices = @transform_0, window_bounds = array<i64: 8, 32>}, {transform_indices = @transform_1, window_bounds = array<i64: 8, 32>}, {transform_indices = @transform_2, window_bounds = array<i64: 8, 1>}]} {
    %c0 = arith.constant 0 : index
    %c0_0 = arith.constant 0 : index
    %0 = vector.load %arg1[%c0, %c0_0] : memref<8x32xf32, #tpu.memory_space<vmem>>, vector<8x32xf32>
    %cst = arith.constant 1.000000e-10 : f32
    %1 = vector.broadcast %cst : f32 to vector<8x32xf32>
    %2 = arith.addf %0, %1 : vector<8x32xf32>
    %c0_1 = arith.constant 0 : index
    %c0_2 = arith.constant 0 : index
    %3 = vector.load %arg2[%c0_1, %c0_2] : memref<8x32xf32, #tpu.memory_space<vmem>>, vector<8x32xf32>
    %cst_3 = arith.constant 1.000000e-10 : f32
    %4 = vector.broadcast %cst_3 : f32 to vector<8x32xf32>
    %5 = arith.addf %3, %4 : vector<8x32xf32>
    %cst_4 = arith.constant dense<0.000000e+00> : vector<8xf32>
    %6 = vector.multi_reduction <add>, %2, %cst_4 [1] : vector<8x32xf32> to vector<8xf32>
    %7 = vector.shape_cast %6 : vector<8xf32> to vector<8x1xf32>
    %8 = tpu.reciprocal %7 : vector<8x1xf32> -> vector<8x1xf32>
    %9 = vector.broadcast %8 : vector<8x1xf32> to vector<8x32xf32>
    %10 = arith.mulf %2, %9 : vector<8x32xf32>
    %cst_5 = arith.constant dense<0.000000e+00> : vector<8xf32>
    %11 = vector.multi_reduction <add>, %5, %cst_5 [1] : vector<8x32xf32> to vector<8xf32>
    %12 = vector.shape_cast %11 : vector<8xf32> to vector<8x1xf32>
    %13 = tpu.reciprocal %12 : vector<8x1xf32> -> vector<8x1xf32>
    %14 = vector.broadcast %13 : vector<8x1xf32> to vector<8x32xf32>
    %15 = arith.mulf %5, %14 : vector<8x32xf32>
    %16 = arith.addf %10, %15 : vector<8x32xf32>
    %17 = math.log %10 : vector<8x32xf32>
    %18 = arith.mulf %10, %17 : vector<8x32xf32>
    %19 = math.log %15 : vector<8x32xf32>
    %20 = arith.mulf %15, %19 : vector<8x32xf32>
    %21 = arith.addf %18, %20 : vector<8x32xf32>
    %22 = math.log %16 : vector<8x32xf32>
    %23 = arith.mulf %16, %22 : vector<8x32xf32>
    %24 = arith.subf %21, %23 : vector<8x32xf32>
    %cst_6 = arith.constant dense<0.000000e+00> : vector<8xf32>
    %25 = vector.multi_reduction <add>, %24, %cst_6 [1] : vector<8x32xf32> to vector<8xf32>
    %26 = vector.shape_cast %25 : vector<8xf32> to vector<8x1xf32>
    %cst_7 = arith.constant 5.000000e-01 : f32
    %27 = vector.broadcast %cst_7 : f32 to vector<8x1xf32>
    %28 = arith.mulf %27, %26 : vector<8x1xf32>
    %cst_8 = arith.constant 0.693147182 : f32
    %29 = vector.broadcast %cst_8 : f32 to vector<8x1xf32>
    %30 = arith.addf %28, %29 : vector<8x1xf32>
    %c0_9 = arith.constant 0 : index
    %c0_10 = arith.constant 0 : index
    %31 = vector.load %arg3[%c0_9, %c0_10] : memref<8x1xf32, #tpu.memory_space<vmem>>, vector<8x1xf32>
    tpu.vector_store %arg3[%c0_9, %c0_10], %30 {strides = array<i32>} : memref<8x1xf32, #tpu.memory_space<vmem>>, vector<8x1xf32>,
    return
  }
  func.func @transform_0(%arg0: i32) -> (i32, i32) {
    %c0_i32 = arith.constant 0 : i32
    %c0_i32_0 = arith.constant 0 : i32
    return %arg0, %c0_i32 : i32, i32
  }
  func.func @transform_1(%arg0: i32) -> (i32, i32) {
    %c0_i32 = arith.constant 0 : i32
    %c0_i32_0 = arith.constant 0 : i32
    return %arg0, %c0_i32 : i32, i32
  }
  func.func @transform_2(%arg0: i32) -> (i32, i32) {
    %c0_i32 = arith.constant 0 : i32
    %c0_i32_0 = arith.constant 0 : i32
    return %arg0, %c0_i32 : i32, i32
  }
}

</mosaic_0001>

<llo_original>
// kernel: tpu_custom_call.1
$region0: #{tpu_custom_call.1}
  #allocation0 [shape = 'u32[]', space=smem, size = 0x4, offset = 0x4, fixed_abs, tag = 'smem constant byte address 0x4 - core index']
  #allocation1 [shape = 'u32[72,128]{1,0:T(1,128)}', space=vmem, size = 0x9000, scoped, tag = 'internal scratch']
  %s0 = inlined_call_operand.hbm [shape: f32[16,32], index: 0, kind: input, shape index: {}]
  %s1 = inlined_call_operand.hbm [shape: f32[16,32], index: 1, kind: input, shape index: {}]
  %s2 = inlined_call_operand.vmem [shape: f32[16,1], index: 2, kind: output, shape index: {}]
  %s3 = sld [smem:[#allocation0]]
  $region49: #{tpu_custom_call.1} parent=0
    _
  %s5 = ssub.s32 1, %s3
  %s6 = scalar_select 0, %s5, %s3
  $region1: #{tpu_custom_call.1} parent=0
    #allocation2 [shape = 'u8[8192]{0}', space=vmem, size = 0x2000, scoped, tag = 'input window, operand 0']
    #allocation3 [shape = 's32[2]{0}', space=sflag, size = 0x8, scoped, tag = 'scoped memory for tpu_custom_call.1']
    #allocation4 [shape = 'u8[8192]{0}', space=vmem, size = 0x2000, scoped, tag = 'input window, operand 1']
    #allocation5 [shape = 's32[2]{0}', space=sflag, size = 0x8, scoped, tag = 'scoped memory for tpu_custom_call.1']
    %7 = vsyncpa [#allocation3], 0
    %s8 = scalar_lea.sflag [#allocation3], 1
    %9 = vsyncpa %s8, 0
    %10 = vsyncpa [#allocation5], 0
    %s11 = scalar_lea.sflag [#allocation5], 1
    %12 = vsyncpa %s11, 0
    loop: start=0, step=1, limit=4
    $region2: #{tpu_custom_call.1} parent=1 // loop_pre_header
      _
    $region3: #{tpu_custom_call.1} parent=1 // loop_header
      %s14 = sphi 0, %s18
      %p15 = scmp.ge.s32.totalorder %s14, 4
      %s24 = sphi 0, %s26
      %s27 = sphi 0, %s24
      %s28 = sphi 0, %s27
      %s44 = sphi 0, %s28
      %s50 = sphi 0, %s52
      %s53 = sphi 0, %s50
      %s54 = sphi 0, %s53
      %s70 = sphi 0, %s54
      %s76 = sphi 0, %s78
      %s79 = sphi 0, %s76
      %s80 = sphi 0, %s79
      %s96 = sphi 0, %s80
    $region4: #{tpu_custom_call.1} parent=1 // loop_header_branch
      %17 = sbr.rel (%p15) target = $region8
    $region5: #{tpu_custom_call.1} parent=1 // loop_body
      %s19 = ssub.s32 %s14, 1
      %s20 = ssub.s32 %s14, 2
      %s21 = sadd.s32 %s14, 1
      %s22 = ssub.s32 %s14, %s21
      %p23 = scmp.eq.s32.totalorder %s22, 0
      %s25 = sadd.s32 %s24, 1
      %s26 = scalar_select %p23, %s24, %s25
      %p29 = pneg %p23
      %p30 = scmp.eq.s32.totalorder %s14, 1
      %p31 = por %p29, %p30
      %p32 = scmp.ne.s32.totalorder %s24, %s27
      %p33 = scmp.eq.s32.totalorder %s14, 0
      %p34 = por %p32, %p33
      %p35 = scmp.ne.s32.totalorder %s24, %s27
      %p36 = scmp.eq.s32.totalorder %s19, 1
      %p37 = por %p35, %p36
      %p38 = scmp.ne.s32.totalorder %s27, %s28
      %p39 = scmp.eq.s32.totalorder %s19, 0
      %p40 = por %p38, %p39
      %p41 = scmp.ne.s32.totalorder %s27, %s28
      %p42 = scmp.eq.s32.totalorder %s20, 1
      %p43 = por %p41, %p42
      %p45 = scmp.ne.s32.totalorder %s28, %s44
      %p46 = scmp.eq.s32.totalorder %s20, 0
      %p47 = por %p45, %p46
      %s48 = ssub.s32 %s14, %s21
      %p49 = scmp.eq.s32.totalorder %s48, 0
      %s51 = sadd.s32 %s50, 1
      %s52 = scalar_select %p49, %s50, %s51
      %p55 = pneg %p49
      %p56 = scmp.eq.s32.totalorder %s14, 1
      %p57 = por %p55, %p56
      %p58 = scmp.ne.s32.totalorder %s50, %s53
      %p59 = scmp.eq.s32.totalorder %s14, 0
      %p60 = por %p58, %p59
      %p61 = scmp.ne.s32.totalorder %s50, %s53
      %p62 = scmp.eq.s32.totalorder %s19, 1
      %p63 = por %p61, %p62
      %p64 = scmp.ne.s32.totalorder %s53, %s54
      %p65 = scmp.eq.s32.totalorder %s19, 0
      %p66 = por %p64, %p65
      %p67 = scmp.ne.s32.totalorder %s53, %s54
      %p68 = scmp.eq.s32.totalorder %s20, 1
      %p69 = por %p67, %p68
      %p71 = scmp.ne.s32.totalorder %s54, %s70
      %p72 = scmp.eq.s32.totalorder %s20, 0
      %p73 = por %p71, %p72
      %s74 = ssub.s32 %s14, %s21
      %p75 = scmp.eq.s32.totalorder %s74, 0
      %s77 = sadd.s32 %s76, 1
      %s78 = scalar_select %p75, %s76, %s77
      %p81 = pneg %p75
      %p82 = scmp.eq.s32.totalorder %s14, 1
      %p83 = por %p81, %p82
      %p84 = scmp.ne.s32.totalorder %s76, %s79
      %p85 = scmp.eq.s32.totalorder %s14, 0
      %p86 = por %p84, %p85
      %p87 = scmp.ne.s32.totalorder %s76, %s79
      %p88 = scmp.eq.s32.totalorder %s19, 1
      %p89 = por %p87, %p88
      %p90 = scmp.ne.s32.totalorder %s79, %s80
      %p91 = scmp.eq.s32.totalorder %s19, 0
      %p92 = por %p90, %p91
      %p93 = scmp.ne.s32.totalorder %s79, %s80
      %p94 = scmp.eq.s32.totalorder %s20, 1
      %p95 = por %p93, %p94
      %p97 = scmp.ne.s32.totalorder %s80, %s96
      %p98 = scmp.eq.s32.totalorder %s20, 0
      %p99 = por %p97, %p98
      %p100 = scmp.le.s32.totalorder 1, %s14
      %p101 = scmp.lt.s32.totalorder %s14, 3
      %p102 = pnand %p100, %p101
      %p103 = pneg %p102
      // Predicated region
      $region9: #{tpu_custom_call.1} parent=5 // pred_check
        _
      $region10: #{tpu_custom_call.1} parent=5 // pred_check_branch
        %105 = sbr.rel (%p102) target = $region12
      $region11: #{tpu_custom_call.1} parent=5 // pred_region
        %s106 = ssub.s32 %s14, 1
      $region12: #{tpu_custom_call.1} parent=5 // pred_fallthru
        _
      %p107 = scmp.lt.s32.totalorder %s14, 2
      // Predicated region
      $region13: #{tpu_custom_call.1} parent=5 // pred_check
        %p108 = pneg %p107
      $region14: #{tpu_custom_call.1} parent=5 // pred_check_branch
        %110 = sbr.rel (%p108) target = $region16
      $region15: #{tpu_custom_call.1} parent=5 // pred_region
        // Predicated region
        $region17: #{tpu_custom_call.1} parent=15 // pred_check
          %p111 = pneg %p34
        $region18: #{tpu_custom_call.1} parent=15 // pred_check_branch
          %113 = sbr.rel (%p111) target = $region20
        $region19: #{tpu_custom_call.1} parent=15 // pred_region
          %s114 = sand.u32 %s24, 1
          %s115 = scalar_lea.sflag [#allocation3], %s114
          %s116 = sand.u32 %s24, 1
          %s117 = smul.addr %s116, 8
          %s118 = scalar_lea.vmem [#allocation2], %s117
          %120 = vsyncadd %s115, 0
          %s121 = smul.addr %s14, 8
          %s122 = scalar_lea.hbm %s0, %s121
          %s124 = sshll.u32 %s122, 4
          %s125 = int_to_ptr.hbm [resolvable:$true] %s124
          %s126 = sshll.u32 %s118, 4
          %s127 = int_to_ptr.vmem [resolvable:$true] %s126
          %129 = dma.hbm_to_vmem [thread:$0]  %s125, 128, %s127, %s115
        $region20: #{tpu_custom_call.1} parent=15 // pred_fallthru
          _
        // Predicated region
        $region21: #{tpu_custom_call.1} parent=15 // pred_check
          %p130 = pneg %p60
        $region22: #{tpu_custom_call.1} parent=15 // pred_check_branch
          %132 = sbr.rel (%p130) target = $region24
        $region23: #{tpu_custom_call.1} parent=15 // pred_region
          %s133 = sand.u32 %s50, 1
          %s134 = scalar_lea.sflag [#allocation5], %s133
          %s135 = sand.u32 %s50, 1
          %s136 = smul.addr %s135, 8
          %s137 = scalar_lea.vmem [#allocation4], %s136
          %139 = vsyncadd %s134, 0
          %s140 = smul.addr %s14, 8
          %s141 = scalar_lea.hbm %s1, %s140
          %s143 = sshll.u32 %s141, 4
          %s144 = int_to_ptr.hbm [resolvable:$true] %s143
          %s145 = sshll.u32 %s137, 4
          %s146 = int_to_ptr.vmem [resolvable:$true] %s145
          %148 = dma.hbm_to_vmem [thread:$0]  %s144, 128, %s146, %s134
        $region24: #{tpu_custom_call.1} parent=15 // pred_fallthru
          _
      $region16: #{tpu_custom_call.1} parent=5 // pred_fallthru
        _
      %p149 = scmp.le.s32.totalorder 1, %s14
      %p150 = scmp.lt.s32.totalorder %s14, 3
      %p151 = pnand %p149, %p150
      %p152 = pneg %p151
      // Predicated region
      $region25: #{tpu_custom_call.1} parent=5 // pred_check
        _
      $region26: #{tpu_custom_call.1} parent=5 // pred_check_branch
        %154 = sbr.rel (%p151) target = $region28
      $region27: #{tpu_custom_call.1} parent=5 // pred_region
        %s155 = ssub.s32 %s14, 1
        %s156 = sand.u32 %s27, 1
        %s157 = scalar_lea.sflag [#allocation3], %s156
        %s158 = sand.u32 %s27, 1
        %s159 = smul.addr %s158, 8
        %s160 = scalar_lea.vmem [#allocation2], %s159
        // Predicated region
        $region29: #{tpu_custom_call.1} parent=27 // pred_check
          %p161 = pneg %p40
        $region30: #{tpu_custom_call.1} parent=27 // pred_check_branch
          %163 = sbr.rel (%p161) target = $region32
        $region31: #{tpu_custom_call.1} parent=27 // pred_region
          %165 = dma.done %s157, 128
        $region32: #{tpu_custom_call.1} parent=27 // pred_fallthru
          _
        %s166 = sand.u32 %s53, 1
        %s167 = scalar_lea.sflag [#allocation5], %s166
        %s168 = sand.u32 %s53, 1
        %s169 = smul.addr %s168, 8
        %s170 = scalar_lea.vmem [#allocation4], %s169
        // Predicated region
        $region33: #{tpu_custom_call.1} parent=27 // pred_check
          %p171 = pneg %p66
        $region34: #{tpu_custom_call.1} parent=27 // pred_check_branch
          %173 = sbr.rel (%p171) target = $region36
        $region35: #{tpu_custom_call.1} parent=27 // pred_region
          %175 = dma.done %s167, 128
        $region36: #{tpu_custom_call.1} parent=27 // pred_fallthru
          _
        %s176 = sand.u32 %s27, 1
        %s177 = scalar_lea.sflag [#allocation3], %s176
        %s178 = sand.u32 %s27, 1
        %s179 = smul.addr %s178, 8
        %s180 = scalar_lea.vmem [#allocation2], %s179
        %p181 = pneg %p40
        %p182 = pneg %p37
        %s183 = sand.u32 %s53, 1
        %s184 = scalar_lea.sflag [#allocation5], %s183
        %s185 = sand.u32 %s53, 1
        %s186 = smul.addr %s185, 8
        %s187 = scalar_lea.vmem [#allocation4], %s186
        %p188 = pneg %p66
        %p189 = pneg %p63
        %p190 = pneg %p92
        %p191 = pneg %p89
        %p192 = scmp.lt.s32.totalorder %s19, 1
        %s193 = scalar_select %p192, %s19, 1
        %s194 = smul.addr %s193, 8
        %s195 = scalar_lea.vmem %s2, %s194
        %p196 = scmp.lt.s32.totalorder %s19, 1
        %s197 = scalar_select %p196, %s19, 1
        %s198 = smul.addr %s197, 8
        %s199 = scalar_lea.vmem %s2, %s198
        %v200 = vld [vmem:[%s160] sm:$0xff]
        %v201 = vadd.f32 %v200, 1e-10
        %v202 = vld [vmem:[%s170] sm:$0xff]
        %v203 = vadd.f32 %v202, 1e-10
        %vm204 = vcmask 261120
        %v205 = vsel %vm204, %v201, 0.0
        %206 = vadd.xlane.f32.xlu0 %v205
        %v207 = vpop.xlane.xlu0 %206
        %v208 = vrcp.pop %v207
        %v209 = vmul.f32 %v207, %v208
        %v210 = vsub.f32 1.0, %v209
        %v211 = vmul.f32 %v208, %v210
        %v212 = vadd.f32 %v208, %v211
        %vm213 = vweird.f32 %v207
        %vm214 = vweird.f32 %v208
        %vm215 = vmor %vm213, %vm214
        %v216 = vsel %vm215, %v208, %v212
        %v217 = vand.u32 2147483647, %v207
        %vm218 = vcmp.eq.f32.partialorder %v217, 8.507059e+37
        %v219 = vand.u32 %v207, 2147483648
        %v220 = vor.u32 1.1754944e-38, %v219
        %v221 = vsel %vm218, %v220, %v216
        %v222 = vmul.f32 %v201, %v221
        %v223 = vsel %vm204, %v203, 0.0
        %224 = vadd.xlane.f32.xlu0 %v223
        %v225 = vpop.xlane.xlu0 %224
        %v226 = vrcp.pop %v225
        %v227 = vmul.f32 %v225, %v226
        %v228 = vsub.f32 1.0, %v227
        %v229 = vmul.f32 %v226, %v228
        %v230 = vadd.f32 %v226, %v229
        %vm231 = vweird.f32 %v225
        %vm232 = vweird.f32 %v226
        %vm233 = vmor %vm231, %vm232
        %v234 = vsel %vm233, %v226, %v230
        %v235 = vand.u32 2147483647, %v225
        %vm236 = vcmp.eq.f32.partialorder %v235, 8.507059e+37
        %v237 = vand.u32 %v225, 2147483648
        %v238 = vor.u32 1.1754944e-38, %v237
        %v239 = vsel %vm236, %v238, %v234
        %v240 = vmul.f32 %v203, %v239
        %v241 = vadd.f32 %v222, %v240
        %v242 = vlog2.pop %v222
        %v243 = vmul.f32 %v242, 0.6931472
        %v244 = vmul.f32 %v222, %v243
        %v245 = vlog2.pop %v240
        %v246 = vmul.f32 %v245, 0.6931472
        %v247 = vmul.f32 %v240, %v246
        %v248 = vadd.f32 %v244, %v247
        %v249 = vlog2.pop %v241
        %v250 = vmul.f32 %v249, 0.6931472
        %v251 = vmul.f32 %v241, %v250
        %v252 = vsub.f32 %v248, %v251
        %v253 = vsel %vm204, %v252, 0.0
        %254 = vadd.xlane.f32.xlu0 %v253
        %v255 = vpop.xlane.xlu0 %254
        %v256 = vmul.f32 %v255, 0.5
        %v257 = vadd.f32 %v256, 0.6931472
        %vm258 = vcmask 7168
        %259 = vst.msk [vmem:[%s199] sm:$0xff] %vm258, %v257
        %p260 = scmp.lt.s32.totalorder %s19, 1
        %s261 = scalar_select %p260, %s19, 1
        %s262 = smul.addr %s261, 8
        %s263 = scalar_lea.vmem %s2, %s262
        // Predicated region
        $region37: #{tpu_custom_call.1} parent=27 // pred_check
          %p264 = pneg %p89
        $region38: #{tpu_custom_call.1} parent=27 // pred_check_branch
          %266 = sbr.rel (%p264) target = $region40
        $region39: #{tpu_custom_call.1} parent=27 // pred_region
          _
        $region40: #{tpu_custom_call.1} parent=27 // pred_fallthru
          _
      $region28: #{tpu_custom_call.1} parent=5 // pred_fallthru
        _
      %p267 = scmp.le.s32.totalorder 2, %s14
      // Predicated region
      $region41: #{tpu_custom_call.1} parent=5 // pred_check
        %p268 = pneg %p267
      $region42: #{tpu_custom_call.1} parent=5 // pred_check_branch
        %270 = sbr.rel (%p268) target = $region44
      $region43: #{tpu_custom_call.1} parent=5 // pred_region
        %s271 = ssub.s32 %s14, 2
        // Predicated region
        $region45: #{tpu_custom_call.1} parent=43 // pred_check
          %p272 = pneg %p95
        $region46: #{tpu_custom_call.1} parent=43 // pred_check_branch
          %274 = sbr.rel (%p272) target = $region48
        $region47: #{tpu_custom_call.1} parent=43 // pred_region
          %p275 = scmp.lt.s32.totalorder %s20, 1
          %s276 = scalar_select %p275, %s20, 1
          %s277 = smul.addr %s276, 8
          %s278 = scalar_lea.vmem %s2, %s277
        $region48: #{tpu_custom_call.1} parent=43 // pred_fallthru
          _
      $region44: #{tpu_custom_call.1} parent=5 // pred_fallthru
        _
    $region6: #{tpu_custom_call.1} parent=1 // loop_footer
      %s18 = sadd.s32 1, %s14
    $region7: #{tpu_custom_call.1} parent=1 // loop_footer_branch
      %13 = sbr.rel target = $region3
    $region8: #{tpu_custom_call.1} parent=1 // loop_exit
      _
    %279 = vsyncpa [#allocation3], 1
    %s280 = scalar_lea.sflag [#allocation3], 1
    %281 = vsyncpa %s280, 1
    %282 = vsyncpa [#allocation5], 1
    %s283 = scalar_lea.sflag [#allocation5], 1
    %284 = vsyncpa %s283, 1

</llo_original>
